<compile_context>
chip_gen: v7x
topology: tpu7x:2x2x1
jax: 0.10.0
libtpu: 0.0.40
codegen_flags: <defaults>
</compile_context>

<pallas_src>
import jax
import jax.numpy as jnp
from jax import lax
from jax.experimental import pallas as pl
from jax.experimental.pallas import tpu as pltpu

EPS = 1e-6


def _read_head_kernel(mem_ref, keys_ref, par_ref, fwd_ref, bwd_ref, out_ref):
    mem = mem_ref[...]        # [Bb, N, W]
    keys = keys_ref[...]      # [Bb, H, W]
    params = par_ref[...]     # [Bb, H, 4] = (oneplus(beta), g_bwd, g_content, g_fwd)
    fwd = fwd_ref[...]        # [Bb, H, N]
    bwd = bwd_ref[...]        # [Bb, H, N]

    betas = params[..., 0:1]  # [Bb, H, 1]
    g_bwd = params[..., 1:2]
    g_cnt = params[..., 2:3]
    g_fwd = params[..., 3:4]

    # --- content addressing: beta-scaled cosine similarity, softmax over cells.
    # Batched contraction on W (RHS consumed transposed natively; no mem.T).
    dot = jnp.einsum("bhw,bnw->bhn", keys, mem,
                     preferred_element_type=jnp.float32)         # [Bb, H, N]
    kk = jnp.sum(keys * keys, axis=-1, keepdims=True)            # [Bb, H, 1]
    mm = jnp.sum(mem * mem, axis=-1)[:, None, :]                 # [Bb, 1, N]
    scores = dot * betas * lax.rsqrt(kk * mm + EPS)              # [Bb, H, N]
    scores = scores - jnp.max(scores, axis=-1, keepdims=True)
    se = jnp.exp(scores)
    inv_den = pl.reciprocal(jnp.sum(se, axis=-1, keepdims=True), approx=True)
    content = se * inv_den                                       # [Bb, H, N]

    # --- gate mixing: backward * g0 + content * g1 + forward * g2
    read_dist = bwd * g_bwd + content * g_cnt + fwd * g_fwd      # [Bb, H, N]

    # --- read: weighted sum over memory cells (batched dist @ memory)
    read_data = jnp.einsum("bhn,bnw->bhw", read_dist, mem,
                           preferred_element_type=jnp.float32)   # [Bb, H, W]

    # Lane-dense store: flatten heads into lanes (H*W lanes per batch row).
    bb, h, w = read_data.shape
    out_ref[...] = read_data.reshape(bb, 1, h * w).astype(out_ref.dtype)


def _pick_batch_block(batch, max_block=8):
    """Largest divisor of `batch` <= max_block that still leaves >=2 grid steps
    (keeps both v7x TensorCores busy); max_block kept modest so double-buffered
    blocks fit v7x's 64 MiB VMEM at realistic DNC sizes."""
    if batch <= 1:
        return 1
    target = min(max_block, max(1, batch // 2))
    for cand in range(target, 0, -1):
        if batch % cand == 0:
            return cand
    return 1


def raw_read_head_forward(memory, nn_output, forward_dist, backward_dist,
                          n_heads, word_length, use_mask=False,
                          batch_block=None):
    """Pallas implementation of RawReadHead.forward (module defaults:
    use_mask=False, disable_content_norm=False, mask_min=0.0,
    disable_key_masking=False)."""
    if use_mask:
        # TODO(synk): use_mask=True path (sigmoid read mask applied per-head to
        # memory and keys) not implemented; module default is use_mask=False.
        raise NotImplementedError("use_mask=True path not implemented")

    B, N, W = memory.shape
    H = n_heads
    assert W == word_length
    assert nn_output.shape == (B, H * (W + 3 + 1))

    # split_tensor glue + tiny per-head preprocessing in plain JAX:
    keys = nn_output[:, : H * W].reshape(B, H, W)
    betas = 1.0 + jax.nn.softplus(nn_output[:, H * W: H * W + H]).reshape(B, H, 1)
    gates = jax.nn.softmax(nn_output[:, H * W + H:].reshape(B, H, 3), axis=-1)
    params = jnp.concatenate([betas, gates], axis=-1)            # [B, H, 4]

    b_blk = batch_block if batch_block is not None else _pick_batch_block(B)
    assert B % b_blk == 0, "batch block must divide batch"
    grid = (B // b_blk,)

    out = pl.pallas_call(
        _read_head_kernel,
        out_shape=jax.ShapeDtypeStruct((B, 1, H * W), memory.dtype),
        grid=grid,
        in_specs=[
            pl.BlockSpec((b_blk, N, W), lambda b: (b, 0, 0)),   # memory
            pl.BlockSpec((b_blk, H, W), lambda b: (b, 0, 0)),   # keys
            pl.BlockSpec((b_blk, H, 4), lambda b: (b, 0, 0)),   # packed beta+gates
            pl.BlockSpec((b_blk, H, N), lambda b: (b, 0, 0)),   # forward_dist
            pl.BlockSpec((b_blk, H, N), lambda b: (b, 0, 0)),   # backward_dist
        ],
        out_specs=pl.BlockSpec((b_blk, 1, H * W), lambda b: (b, 0, 0)),
        compiler_params=pltpu.CompilerParams(
            dimension_semantics=("parallel",)),
    )(memory, keys, params, forward_dist, backward_dist)
    return out.reshape(B, H, W)


def _reference(memory, nn_output, forward_dist, backward_dist, H, W):
    """Pure-JAX reference mirroring the PyTorch semantics."""
    B, N, _ = memory.shape
    keys = nn_output[:, : H * W].reshape(B, H, W)
    betas = 1.0 + jax.nn.softplus(nn_output[:, H * W: H * W + H])       # [B,H]
    gates = jax.nn.softmax(nn_output[:, H * W + H:].reshape(B, H, 3), -1)

    dot = jnp.einsum("bhw,bnw->bhn", keys, memory)
    kk = jnp.sum(keys * keys, -1)                                        # [B,H]
    mm = jnp.sum(memory * memory, -1)                                    # [B,N]
    norms = kk[:, :, None] * mm[:, None, :]
    scores = dot * betas[..., None] / jnp.sqrt(norms + EPS)
    content = jax.nn.softmax(scores, -1)

    read_dist = (backward_dist * gates[..., 0:1]
                 + content * gates[..., 1:2]
                 + forward_dist * gates[..., 2:3])
    return jnp.einsum("bhn,bnw->bhw", read_dist, memory)


if __name__ == "__main__":
    B, N, W, H = 2, 16, 32, 4          # batch, cells, word_length, n_heads
    input_size = H * (W + 3 + 1)       # use_mask=False -> 144

    key = jax.random.PRNGKey(0)
    k1, k2, k3, k4 = jax.random.split(key, 4)
    memory = jax.random.normal(k1, (B, N, W), dtype=jnp.float32)
    nn_output = jax.random.normal(k2, (B, input_size), dtype=jnp.float32)
    forward_dist = jax.nn.softmax(
        jax.random.normal(k3, (B, H, N), dtype=jnp.float32), axis=-1)
    backward_dist = jax.nn.softmax(
        jax.random.normal(k4, (B, H, N), dtype=jnp.float32), axis=-1)

    read_data = raw_read_head_forward(memory, nn_output, forward_dist,
                                      backward_dist, n_heads=H,
                                      word_length=W)
    read_data = jax.block_until_ready(read_data)

    ref = _reference(memory, nn_output, forward_dist, backward_dist, H, W)
    # Tolerance is loosened only because the in-kernel softmax normalization
    # uses the EUP approximate reciprocal (~1e-3 relative); structural bugs
    # would produce O(1) errors.
    if not jnp.allclose(read_data, ref, atol=2e-2, rtol=2e-2):
        raise AssertionError("Pallas kernel output does not match reference")

    print("KERNEL_OK")
</pallas_src>

<mosaic_0001>
module attributes {stable_mosaic.version = 11 : i64} {
  func.func @_read_head_kernel(%arg0: i32, %arg1: memref<1x16x32xf32, #tpu.memory_space<vmem>>, %arg2: memref<1x4x32xf32, #tpu.memory_space<vmem>>, %arg3: memref<1x4x4xf32, #tpu.memory_space<vmem>>, %arg4: memref<1x4x16xf32, #tpu.memory_space<vmem>>, %arg5: memref<1x4x16xf32, #tpu.memory_space<vmem>>, %arg6: memref<1x1x128xf32, #tpu.memory_space<vmem>>) attributes {dimension_semantics = [#tpu.dimension_semantics<parallel>], iteration_bounds = array<i64: 2>, scalar_prefetch = 0 : i64, scratch_operands = 0 : i64, tpu.core_type = #tpu.core_type<tc>, window_params = [{transform_indices = @transform_0, window_bounds = array<i64: 1, 16, 32>}, {transform_indices = @transform_1, window_bounds = array<i64: 1, 4, 32>}, {transform_indices = @transform_2, window_bounds = array<i64: 1, 4, 4>}, {transform_indices = @transform_3, window_bounds = array<i64: 1, 4, 16>}, {transform_indices = @transform_4, window_bounds = array<i64: 1, 4, 16>}, {transform_indices = @transform_5, window_bounds = array<i64: 1, 1, 128>}]} {
    %c0 = arith.constant 0 : index
    %c0_0 = arith.constant 0 : index
    %c0_1 = arith.constant 0 : index
    %0 = vector.load %arg1[%c0, %c0_0, %c0_1] : memref<1x16x32xf32, #tpu.memory_space<vmem>>, vector<1x16x32xf32>
    %c0_2 = arith.constant 0 : index
    %c0_3 = arith.constant 0 : index
    %c0_4 = arith.constant 0 : index
    %1 = vector.load %arg2[%c0_2, %c0_3, %c0_4] : memref<1x4x32xf32, #tpu.memory_space<vmem>>, vector<1x4x32xf32>
    %c0_5 = arith.constant 0 : index
    %c0_6 = arith.constant 0 : index
    %c0_7 = arith.constant 0 : index
    %2 = vector.load %arg3[%c0_5, %c0_6, %c0_7] : memref<1x4x4xf32, #tpu.memory_space<vmem>>, vector<1x4x4xf32>
    %c0_8 = arith.constant 0 : index
    %c0_9 = arith.constant 0 : index
    %c0_10 = arith.constant 0 : index
    %3 = vector.load %arg4[%c0_8, %c0_9, %c0_10] : memref<1x4x16xf32, #tpu.memory_space<vmem>>, vector<1x4x16xf32>
    %c0_11 = arith.constant 0 : index
    %c0_12 = arith.constant 0 : index
    %c0_13 = arith.constant 0 : index
    %4 = vector.load %arg5[%c0_11, %c0_12, %c0_13] : memref<1x4x16xf32, #tpu.memory_space<vmem>>, vector<1x4x16xf32>
    %5 = vector.extract_strided_slice %2 {offsets = [0, 0, 0], sizes = [1, 4, 1], strides = [1, 1, 1]} : vector<1x4x4xf32> to vector<1x4x1xf32>
    %6 = vector.extract_strided_slice %2 {offsets = [0, 0, 1], sizes = [1, 4, 1], strides = [1, 1, 1]} : vector<1x4x4xf32> to vector<1x4x1xf32>
    %7 = vector.extract_strided_slice %2 {offsets = [0, 0, 2], sizes = [1, 4, 1], strides = [1, 1, 1]} : vector<1x4x4xf32> to vector<1x4x1xf32>
    %8 = vector.extract_strided_slice %2 {offsets = [0, 0, 3], sizes = [1, 4, 1], strides = [1, 1, 1]} : vector<1x4x4xf32> to vector<1x4x1xf32>
    "tpu.trace_start"() <{level = 10 : i32, message = "bhw,bnw->bhn"}> : () -> ()
    %cst = arith.constant dense<0.000000e+00> : vector<1x4x16xf32>
    %9 = tpu.matmul %1, %0, %cst {dimension_numbers = #tpu.dot_dimension_numbers<[2], [2], [1], [1], [0, 0, 0, 1, 1, 1], [0], [0]>} : vector<1x4x32xf32>, vector<1x16x32xf32>, vector<1x4x16xf32> -> vector<1x4x16xf32>
    "tpu.trace_stop"() : () -> ()
    %10 = arith.mulf %1, %1 : vector<1x4x32xf32>
    %cst_14 = arith.constant dense<0.000000e+00> : vector<1x4xf32>
    %11 = vector.multi_reduction <add>, %10, %cst_14 [2] : vector<1x4x32xf32> to vector<1x4xf32>
    %12 = vector.shape_cast %11 : vector<1x4xf32> to vector<1x4x1xf32>
    %13 = arith.mulf %0, %0 : vector<1x16x32xf32>
    %cst_15 = arith.constant dense<0.000000e+00> : vector<1x16xf32>
    %14 = vector.multi_reduction <add>, %13, %cst_15 [2] : vector<1x16x32xf32> to vector<1x16xf32>
    %15 = vector.shape_cast %14 : vector<1x16xf32> to vector<1x1x16xf32>
    %16 = vector.broadcast %5 : vector<1x4x1xf32> to vector<1x4x16xf32>
    %17 = arith.mulf %9, %16 : vector<1x4x16xf32>
    %18 = vector.broadcast %12 : vector<1x4x1xf32> to vector<1x4x16xf32>
    %19 = vector.broadcast %15 : vector<1x1x16xf32> to vector<1x4x16xf32>
    %20 = arith.mulf %18, %19 : vector<1x4x16xf32>
    %cst_16 = arith.constant 9.99999997E-7 : f32
    %21 = vector.broadcast %cst_16 : f32 to vector<1x4x16xf32>
    %22 = arith.addf %20, %21 : vector<1x4x16xf32>
    %23 = math.rsqrt %22 : vector<1x4x16xf32>
    %24 = arith.mulf %17, %23 : vector<1x4x16xf32>
    %cst_17 = arith.constant dense<0xFF800000> : vector<1x4xf32>
    %25 = vector.multi_reduction <maximumf>, %24, %cst_17 [2] : vector<1x4x16xf32> to vector<1x4xf32>
    %26 = vector.shape_cast %25 : vector<1x4xf32> to vector<1x4x1xf32>
    %27 = vector.broadcast %26 : vector<1x4x1xf32> to vector<1x4x16xf32>
    %28 = arith.subf %24, %27 : vector<1x4x16xf32>
    %29 = math.exp %28 : vector<1x4x16xf32>
    %cst_18 = arith.constant dense<0.000000e+00> : vector<1x4xf32>
    %30 = vector.multi_reduction <add>, %29, %cst_18 [2] : vector<1x4x16xf32> to vector<1x4xf32>
    %31 = vector.shape_cast %30 : vector<1x4xf32> to vector<1x4x1xf32>
    %32 = tpu.reciprocal %31 {approx = true} : vector<1x4x1xf32> -> vector<1x4x1xf32>
    %33 = vector.broadcast %32 : vector<1x4x1xf32> to vector<1x4x16xf32>
    %34 = arith.mulf %29, %33 : vector<1x4x16xf32>
    %35 = vector.broadcast %6 : vector<1x4x1xf32> to vector<1x4x16xf32>
    %36 = arith.mulf %4, %35 : vector<1x4x16xf32>
    %37 = vector.broadcast %7 : vector<1x4x1xf32> to vector<1x4x16xf32>
    %38 = arith.mulf %34, %37 : vector<1x4x16xf32>
    %39 = arith.addf %36, %38 : vector<1x4x16xf32>
    %40 = vector.broadcast %8 : vector<1x4x1xf32> to vector<1x4x16xf32>
    %41 = arith.mulf %3, %40 : vector<1x4x16xf32>
    %42 = arith.addf %39, %41 : vector<1x4x16xf32>
    "tpu.trace_start"() <{level = 10 : i32, message = "bhn,bnw->bhw"}> : () -> ()
    %cst_19 = arith.constant dense<0.000000e+00> : vector<1x4x32xf32>
    %43 = tpu.matmul %42, %0, %cst_19 {dimension_numbers = #tpu.dot_dimension_numbers<[2], [1], [1], [2], [0, 0, 0, 1, 1, 2], [0], [0]>} : vector<1x4x16xf32>, vector<1x16x32xf32>, vector<1x4x32xf32> -> vector<1x4x32xf32>
    "tpu.trace_stop"() : () -> ()
    %44 = vector.shape_cast %43 : vector<1x4x32xf32> to vector<1x1x128xf32>
    %c0_20 = arith.constant 0 : index
    %c0_21 = arith.constant 0 : index
    %c0_22 = arith.constant 0 : index
    %45 = vector.load %arg6[%c0_20, %c0_21, %c0_22] : memref<1x1x128xf32, #tpu.memory_space<vmem>>, vector<1x1x128xf32>
    tpu.vector_store %arg6[%c0_20, %c0_21, %c0_22], %44 {strides = array<i32>} : memref<1x1x128xf32, #tpu.memory_space<vmem>>, vector<1x1x128xf32>,
    return
  }
  func.func @transform_0(%arg0: i32) -> (i32, i32, i32) {
    %c0_i32 = arith.constant 0 : i32
    %c0_i32_0 = arith.constant 0 : i32
    %c0_i32_1 = arith.constant 0 : i32
    return %arg0, %c0_i32, %c0_i32_0 : i32, i32, i32
  }
  func.func @transform_1(%arg0: i32) -> (i32, i32, i32) {
    %c0_i32 = arith.constant 0 : i32
    %c0_i32_0 = arith.constant 0 : i32
    %c0_i32_1 = arith.constant 0 : i32
    return %arg0, %c0_i32, %c0_i32_0 : i32, i32, i32
  }
  func.func @transform_2(%arg0: i32) -> (i32, i32, i32) {
    %c0_i32 = arith.constant 0 : i32
    %c0_i32_0 = arith.constant 0 : i32
    %c0_i32_1 = arith.constant 0 : i32
    return %arg0, %c0_i32, %c0_i32_0 : i32, i32, i32
  }
  func.func @transform_3(%arg0: i32) -> (i32, i32, i32) {
    %c0_i32 = arith.constant 0 : i32
    %c0_i32_0 = arith.constant 0 : i32
    %c0_i32_1 = arith.constant 0 : i32
    return %arg0, %c0_i32, %c0_i32_0 : i32, i32, i32
  }
  func.func @transform_4(%arg0: i32) -> (i32, i32, i32) {
    %c0_i32 = arith.constant 0 : i32
    %c0_i32_0 = arith.constant 0 : i32
    %c0_i32_1 = arith.constant 0 : i32
    return %arg0, %c0_i32, %c0_i32_0 : i32, i32, i32
  }
  func.func @transform_5(%arg0: i32) -> (i32, i32, i32) {
    %c0_i32 = arith.constant 0 : i32
    %c0_i32_0 = arith.constant 0 : i32
    %c0_i32_1 = arith.constant 0 : i32
    return %arg0, %c0_i32, %c0_i32_0 : i32, i32, i32
  }
}

</mosaic_0001>

<llo_original>
// kernel: tpu_custom_call.1
$region0: #{tpu_custom_call.1}
  #allocation0 [shape = 'u32[]', space=smem, size = 0x4, offset = 0x4, fixed_abs, tag = 'smem constant byte address 0x4 - core index']
  #allocation1 [shape = 'u32[144,128]{1,0:T(1,128)}', space=vmem, size = 0x12000, scoped, tag = 'internal scratch']
  %s0 = inlined_call_operand.hbm [shape: f32[2,16,32], index: 0, kind: input, shape index: {}]
  %s1 = inlined_call_operand.hbm [shape: f32[2,4,32], index: 1, kind: input, shape index: {}]
  %s2 = inlined_call_operand.hbm [shape: f32[2,4,4], index: 2, kind: input, shape index: {}]
  %s3 = inlined_call_operand.vmem [shape: f32[2,4,16], index: 3, kind: input, shape index: {}]
  %s4 = inlined_call_operand.hbm [shape: f32[2,4,16], index: 4, kind: input, shape index: {}]
  %s5 = inlined_call_operand.hbm [shape: f32[2,1,128], index: 5, kind: output, shape index: {}]
  %s6 = sld [smem:[#allocation0]]
  $region69: #{tpu_custom_call.1} parent=0
    _
  %s8 = ssub.s32 1, %s6
  %s9 = scalar_select 0, %s8, %s6
  $region1: #{tpu_custom_call.1} parent=0
    #allocation2 [shape = 'u8[16384]{0}', space=vmem, size = 0x4000, scoped, tag = 'input window, operand 0']
    #allocation3 [shape = 's32[2]{0}', space=sflag, size = 0x8, scoped, tag = 'scoped memory for tpu_custom_call.1']
    #allocation4 [shape = 's32[2]{0}', space=sflag, size = 0x8, scoped, tag = 'scoped memory for tpu_custom_call.1']
    #allocation5 [shape = 'u8[4096]{0}', space=vmem, size = 0x1000, scoped, tag = 'input window, operand 1']
    #allocation6 [shape = 's32[2]{0}', space=sflag, size = 0x8, scoped, tag = 'scoped memory for tpu_custom_call.1']
    #allocation7 [shape = 'u8[4096]{0}', space=vmem, size = 0x1000, scoped, tag = 'input window, operand 2']
    #allocation8 [shape = 'u8[4096]{0}', space=vmem, size = 0x1000, scoped, tag = 'input window, operand 4']
    #allocation9 [shape = 's32[2]{0}', space=sflag, size = 0x8, scoped, tag = 'scoped memory for tpu_custom_call.1']
    #allocation10 [shape = 'u8[1024]{0}', space=vmem, size = 0x400, scoped, tag = 'output window, operand 0']
    %10 = vsyncpa [#allocation3], 0
    %s11 = scalar_lea.sflag [#allocation3], 1
    %12 = vsyncpa %s11, 0
    %13 = vsyncpa [#allocation6], 0
    %s14 = scalar_lea.sflag [#allocation6], 1
    %15 = vsyncpa %s14, 0
    %16 = vsyncpa [#allocation9], 0
    %s17 = scalar_lea.sflag [#allocation9], 1
    %18 = vsyncpa %s17, 0
    %19 = vsyncpa [#allocation4], 0
    %s20 = scalar_lea.sflag [#allocation4], 1
    %21 = vsyncpa %s20, 0
    loop: start=0, step=1, limit=4
    $region2: #{tpu_custom_call.1} parent=1 // loop_pre_header
      _
    $region3: #{tpu_custom_call.1} parent=1 // loop_header
      %s23 = sphi 0, %s27
      %p24 = scmp.ge.s32.totalorder %s23, 4
      %s33 = sphi 0, %s35
      %s36 = sphi 0, %s33
      %s37 = sphi 0, %s36
      %s53 = sphi 0, %s37
      %s59 = sphi 0, %s61
      %s62 = sphi 0, %s59
      %s63 = sphi 0, %s62
      %s79 = sphi 0, %s63
      %s85 = sphi 0, %s87
      %s88 = sphi 0, %s85
      %s89 = sphi 0, %s88
      %s105 = sphi 0, %s89
      %s111 = sphi 0, %s113
      %s114 = sphi 0, %s111
      %s115 = sphi 0, %s114
      %s131 = sphi 0, %s115
      %s137 = sphi 0, %s139
      %s140 = sphi 0, %s137
      %s141 = sphi 0, %s140
      %s157 = sphi 0, %s141
      %s163 = sphi 0, %s165
      %s166 = sphi 0, %s163
      %s167 = sphi 0, %s166
      %s183 = sphi 0, %s167
    $region4: #{tpu_custom_call.1} parent=1 // loop_header_branch
      %26 = sbr.rel (%p24) target = $region8
    $region5: #{tpu_custom_call.1} parent=1 // loop_body
      %s28 = ssub.s32 %s23, 1
      %s29 = ssub.s32 %s23, 2
      %s30 = sadd.s32 %s23, 1
      %s31 = ssub.s32 %s23, %s30
      %p32 = scmp.eq.s32.totalorder %s31, 0
      %s34 = sadd.s32 %s33, 1
      %s35 = scalar_select %p32, %s33, %s34
      %p38 = pneg %p32
      %p39 = scmp.eq.s32.totalorder %s23, 1
      %p40 = por %p38, %p39
      %p41 = scmp.ne.s32.totalorder %s33, %s36
      %p42 = scmp.eq.s32.totalorder %s23, 0
      %p43 = por %p41, %p42
      %p44 = scmp.ne.s32.totalorder %s33, %s36
      %p45 = scmp.eq.s32.totalorder %s28, 1
      %p46 = por %p44, %p45
      %p47 = scmp.ne.s32.totalorder %s36, %s37
      %p48 = scmp.eq.s32.totalorder %s28, 0
      %p49 = por %p47, %p48
      %p50 = scmp.ne.s32.totalorder %s36, %s37
      %p51 = scmp.eq.s32.totalorder %s29, 1
      %p52 = por %p50, %p51
      %p54 = scmp.ne.s32.totalorder %s37, %s53
      %p55 = scmp.eq.s32.totalorder %s29, 0
      %p56 = por %p54, %p55
      %s57 = ssub.s32 %s23, %s30
      %p58 = scmp.eq.s32.totalorder %s57, 0
      %s60 = sadd.s32 %s59, 1
      %s61 = scalar_select %p58, %s59, %s60
      %p64 = pneg %p58
      %p65 = scmp.eq.s32.totalorder %s23, 1
      %p66 = por %p64, %p65
      %p67 = scmp.ne.s32.totalorder %s59, %s62
      %p68 = scmp.eq.s32.totalorder %s23, 0
      %p69 = por %p67, %p68
      %p70 = scmp.ne.s32.totalorder %s59, %s62
      %p71 = scmp.eq.s32.totalorder %s28, 1
      %p72 = por %p70, %p71
      %p73 = scmp.ne.s32.totalorder %s62, %s63
      %p74 = scmp.eq.s32.totalorder %s28, 0
      %p75 = por %p73, %p74
      %p76 = scmp.ne.s32.totalorder %s62, %s63
      %p77 = scmp.eq.s32.totalorder %s29, 1
      %p78 = por %p76, %p77
      %p80 = scmp.ne.s32.totalorder %s63, %s79
      %p81 = scmp.eq.s32.totalorder %s29, 0
      %p82 = por %p80, %p81
      %s83 = ssub.s32 %s23, %s30
      %p84 = scmp.eq.s32.totalorder %s83, 0
      %s86 = sadd.s32 %s85, 1
      %s87 = scalar_select %p84, %s85, %s86
      %p90 = pneg %p84
      %p91 = scmp.eq.s32.totalorder %s23, 1
      %p92 = por %p90, %p91
      %p93 = scmp.ne.s32.totalorder %s85, %s88
      %p94 = scmp.eq.s32.totalorder %s23, 0
      %p95 = por %p93, %p94
      %p96 = scmp.ne.s32.totalorder %s85, %s88
      %p97 = scmp.eq.s32.totalorder %s28, 1
      %p98 = por %p96, %p97
      %p99 = scmp.ne.s32.totalorder %s88, %s89
      %p100 = scmp.eq.s32.totalorder %s28, 0
      %p101 = por %p99, %p100
      %p102 = scmp.ne.s32.totalorder %s88, %s89
      %p103 = scmp.eq.s32.totalorder %s29, 1
      %p104 = por %p102, %p103
      %p106 = scmp.ne.s32.totalorder %s89, %s105
      %p107 = scmp.eq.s32.totalorder %s29, 0
      %p108 = por %p106, %p107
      %s109 = ssub.s32 %s23, %s30
      %p110 = scmp.eq.s32.totalorder %s109, 0
      %s112 = sadd.s32 %s111, 1
      %s113 = scalar_select %p110, %s111, %s112
      %p116 = pneg %p110
      %p117 = scmp.eq.s32.totalorder %s23, 1
      %p118 = por %p116, %p117
      %p119 = scmp.ne.s32.totalorder %s111, %s114
      %p120 = scmp.eq.s32.totalorder %s23, 0
      %p121 = por %p119, %p120
      %p122 = scmp.ne.s32.totalorder %s111, %s114
      %p123 = scmp.eq.s32.totalorder %s28, 1
      %p124 = por %p122, %p123
      %p125 = scmp.ne.s32.totalorder %s114, %s115
      %p126 = scmp.eq.s32.totalorder %s28, 0
      %p127 = por %p125, %p126
      %p128 = scmp.ne.s32.totalorder %s114, %s115
      %p129 = scmp.eq.s32.totalorder %s29, 1
      %p130 = por %p128, %p129
      %p132 = scmp.ne.s32.totalorder %s115, %s131
      %p133 = scmp.eq.s32.totalorder %s29, 0
      %p134 = por %p132, %p133
      %s135 = ssub.s32 %s23, %s30
      %p136 = scmp.eq.s32.totalorder %s135, 0
      %s138 = sadd.s32 %s137, 1
      %s139 = scalar_select %p136, %s137, %s138
      %p142 = pneg %p136
      %p143 = scmp.eq.s32.totalorder %s23, 1
      %p144 = por %p142, %p143
      %p145 = scmp.ne.s32.totalorder %s137, %s140
      %p146 = scmp.eq.s32.totalorder %s23, 0
      %p147 = por %p145, %p146
      %p148 = scmp.ne.s32.totalorder %s137, %s140
      %p149 = scmp.eq.s32.totalorder %s28, 1
      %p150 = por %p148, %p149
      %p151 = scmp.ne.s32.totalorder %s140, %s141
      %p152 = scmp.eq.s32.totalorder %s28, 0
      %p153 = por %p151, %p152
      %p154 = scmp.ne.s32.totalorder %s140, %s141
      %p155 = scmp.eq.s32.totalorder %s29, 1
      %p156 = por %p154, %p155
      %p158 = scmp.ne.s32.totalorder %s141, %s157
      %p159 = scmp.eq.s32.totalorder %s29, 0
      %p160 = por %p158, %p159
      %s161 = ssub.s32 %s23, %s30
      %p162 = scmp.eq.s32.totalorder %s161, 0
      %s164 = sadd.s32 %s163, 1
      %s165 = scalar_select %p162, %s163, %s164
      %p168 = pneg %p162
      %p169 = scmp.eq.s32.totalorder %s23, 1
      %p170 = por %p168, %p169
      %p171 = scmp.ne.s32.totalorder %s163, %s166
      %p172 = scmp.eq.s32.totalorder %s23, 0
      %p173 = por %p171, %p172
      %p174 = scmp.ne.s32.totalorder %s163, %s166
      %p175 = scmp.eq.s32.totalorder %s28, 1
      %p176 = por %p174, %p175
      %p177 = scmp.ne.s32.totalorder %s166, %s167
      %p178 = scmp.eq.s32.totalorder %s28, 0
      %p179 = por %p177, %p178
      %p180 = scmp.ne.s32.totalorder %s166, %s167
      %p181 = scmp.eq.s32.totalorder %s29, 1
      %p182 = por %p180, %p181
      %p184 = scmp.ne.s32.totalorder %s167, %s183
      %p185 = scmp.eq.s32.totalorder %s29, 0
      %p186 = por %p184, %p185
      %p187 = scmp.le.s32.totalorder 1, %s23
      %p188 = scmp.lt.s32.totalorder %s23, 3
      %p189 = pnand %p187, %p188
      %p190 = pneg %p189
      // Predicated region
      $region9: #{tpu_custom_call.1} parent=5 // pred_check
        _
      $region10: #{tpu_custom_call.1} parent=5 // pred_check_branch
        %192 = sbr.rel (%p189) target = $region12
      $region11: #{tpu_custom_call.1} parent=5 // pred_region
        %s193 = ssub.s32 %s23, 1
      $region12: #{tpu_custom_call.1} parent=5 // pred_fallthru
        _
      %p194 = scmp.lt.s32.totalorder %s23, 2
      // Predicated region
      $region13: #{tpu_custom_call.1} parent=5 // pred_check
        %p195 = pneg %p194
      $region14: #{tpu_custom_call.1} parent=5 // pred_check_branch
        %197 = sbr.rel (%p195) target = $region16
      $region15: #{tpu_custom_call.1} parent=5 // pred_region
        // Predicated region
        $region17: #{tpu_custom_call.1} parent=15 // pred_check
          %p198 = pneg %p43
        $region18: #{tpu_custom_call.1} parent=15 // pred_check_branch
          %200 = sbr.rel (%p198) target = $region20
        $region19: #{tpu_custom_call.1} parent=15 // pred_region
          %s201 = sand.u32 %s33, 1
          %s202 = scalar_lea.sflag [#allocation3], %s201
          %s203 = sand.u32 %s33, 1
          %s204 = smul.addr %s203, 16
          %s205 = scalar_lea.vmem [#allocation2], %s204
          %s207 = ssub.s32 256, 256
          %208 = vsyncadd %s202, %s207
          %s209 = smul.addr %s23, 2
          %s210 = smul.addr %s209, 128
          %s211 = scalar_lea.hbm %s0, %s210
          %s212 = sshll.u32 %s205, 4
          %s213 = int_to_ptr.vmem [resolvable:$true] %s212
          %218 = dma.hbm_to_vmem [thread:$0]  %s211, 256, %s213, %s202, 128, 128, 8
        $region20: #{tpu_custom_call.1} parent=15 // pred_fallthru
          _
        // Predicated region
        $region21: #{tpu_custom_call.1} parent=15 // pred_check
          %p219 = pneg %p69
        $region22: #{tpu_custom_call.1} parent=15 // pred_check_branch
          %221 = sbr.rel (%p219) target = $region24
        $region23: #{tpu_custom_call.1} parent=15 // pred_region
          %s222 = sand.u32 %s23, 1
          %s223 = scalar_lea.sflag [#allocation6], %s222
          %s224 = sand.u32 %s59, 1
          %s225 = smul.addr %s224, 4
          %s226 = scalar_lea.vmem [#allocation5], %s225
          %s228 = ssub.s32 64, 64
          %229 = vsyncadd %s223, %s228
          %s230 = smul.addr %s23, 64
          %s231 = scalar_lea.hbm %s1, %s230
          %s233 = sshll.u32 %s226, 4
          %s234 = int_to_ptr.vmem [resolvable:$true] %s233
          %236 = dma.hbm_to_vmem [thread:$0]  %s231, 64, %s234, %s223
        $region24: #{tpu_custom_call.1} parent=15 // pred_fallthru
          _
        // Predicated region
        $region25: #{tpu_custom_call.1} parent=15 // pred_check
          %p237 = pneg %p95
        $region26: #{tpu_custom_call.1} parent=15 // pred_check_branch
          %239 = sbr.rel (%p237) target = $region28
        $region27: #{tpu_custom_call.1} parent=15 // pred_region
          %s240 = sand.u32 %s23, 1
          %s241 = scalar_lea.sflag [#allocation6], %s240
          %s242 = sand.u32 %s85, 1
          %s243 = smul.addr %s242, 4
          %s244 = scalar_lea.vmem [#allocation7], %s243
          %s246 = ssub.s32 64, 64
          %247 = vsyncadd %s241, %s246
          %s248 = smul.addr %s23, 64
          %s249 = scalar_lea.hbm %s2, %s248
          %s251 = sshll.u32 %s244, 4
          %s252 = int_to_ptr.vmem [resolvable:$true] %s251
          %254 = dma.hbm_to_vmem [thread:$0]  %s249, 64, %s252, %s241
        $region28: #{tpu_custom_call.1} parent=15 // pred_fallthru
          _
        // Predicated region
        $region29: #{tpu_custom_call.1} parent=15 // pred_check
          %p255 = pneg %p121
        $region30: #{tpu_custom_call.1} parent=15 // pred_check_branch
          %257 = sbr.rel (%p255) target = $region32
        $region31: #{tpu_custom_call.1} parent=15 // pred_region
          %p258 = scmp.lt.s32.totalorder %s23, 1
          %s259 = scalar_select %p258, %s23, 1
          %s260 = smul.addr %s259, 4
          %s261 = scalar_lea.vmem %s3, %s260
        $region32: #{tpu_custom_call.1} parent=15 // pred_fallthru
          _
        // Predicated region
        $region33: #{tpu_custom_call.1} parent=15 // pred_check
          %p262 = pneg %p147
        $region34: #{tpu_custom_call.1} parent=15 // pred_check_branch
          %264 = sbr.rel (%p262) target = $region36
        $region35: #{tpu_custom_call.1} parent=15 // pred_region
          %s265 = sand.u32 %s137, 1
          %s266 = scalar_lea.sflag [#allocation9], %s265
          %s267 = sand.u32 %s137, 1
          %s268 = smul.addr %s267, 4
          %s269 = scalar_lea.vmem [#allocation8], %s268
          %s271 = ssub.s32 64, 64
          %272 = vsyncadd %s266, %s271
          %s273 = smul.addr %s23, 64
          %s274 = scalar_lea.hbm %s4, %s273
          %s276 = sshll.u32 %s269, 4
          %s277 = int_to_ptr.vmem [resolvable:$true] %s276
          %279 = dma.hbm_to_vmem [thread:$0]  %s274, 64, %s277, %s266
        $region36: #{tpu_custom_call.1} parent=15 // pred_fallthru
          _
      $region16: #{tpu_custom_call.1} parent=5 // pred_fallthru
        _
      %p280 = scmp.le.s32.totalorder 1, %s23
      %p281 = scmp.lt.s32.totalorder %s23, 3
      %p282 = pnand %p280, %p281
      %p283 = pneg %p282
      // Predicated region
      $region37: #{tpu_custom_call.1} parent=5 // pred_check
        _
      $region38: #{tpu_custom_call.1} parent=5 // pred_check_branch
        %285 = sbr.rel (%p282) target = $region40
      $region39: #{tpu_custom_call.1} parent=5 // pred_region
        %s286 = ssub.s32 %s23, 1
        %s287 = sand.u32 %s36, 1
        %s288 = scalar_lea.sflag [#allocation3], %s287
        %s289 = sand.u32 %s36, 1
        %s290 = smul.addr %s289, 16
        %s291 = scalar_lea.vmem [#allocation2], %s290
        // Predicated region
        $region41: #{tpu_custom_call.1} parent=39 // pred_check
          %p292 = pneg %p49
        $region42: #{tpu_custom_call.1} parent=39 // pred_check_branch
          %294 = sbr.rel (%p292) target = $region44
        $region43: #{tpu_custom_call.1} parent=39 // pred_region
          %295 = dma.done %s288, 256
        $region44: #{tpu_custom_call.1} parent=39 // pred_fallthru
          _
        %s296 = sand.u32 %s28, 1
        %s297 = scalar_lea.sflag [#allocation6], %s296
        %s298 = sand.u32 %s62, 1
        %s299 = smul.addr %s298, 4
        %s300 = scalar_lea.vmem [#allocation5], %s299
        // Predicated region
        $region45: #{tpu_custom_call.1} parent=39 // pred_check
          %p301 = pneg %p75
        $region46: #{tpu_custom_call.1} parent=39 // pred_check_branch
          %303 = sbr.rel (%p301) target = $region48
        $region47: #{tpu_custom_call.1} parent=39 // pred_region
          %304 = dma.done %s297, 64
        $region48: #{tpu_custom_call.1} parent=39 // pred_fallthru
          _
        %s305 = sand.u32 %s28, 1
        %s306 = scalar_lea.sflag [#allocation6], %s305
        %s307 = sand.u32 %s88, 1
        %s308 = smul.addr %s307, 4
        %s309 = scalar_lea.vmem [#allocation7], %s308
        // Predicated region
        $region49: #{tpu_custom_call.1} parent=39 // pred_check
          %p310 = pneg %p101
        $region50: #{tpu_custom_call.1} parent=39 // pred_check_branch
          %312 = sbr.rel (%p310) target = $region52
        $region51: #{tpu_custom_call.1} parent=39 // pred_region
          %313 = dma.done %s306, 64
        $region52: #{tpu_custom_call.1} parent=39 // pred_fallthru
          _
        %s314 = sand.u32 %s140, 1
        %s315 = scalar_lea.sflag [#allocation9], %s314
        %s316 = sand.u32 %s140, 1
        %s317 = smul.addr %s316, 4
        %s318 = scalar_lea.vmem [#allocation8], %s317
        // Predicated region
        $region53: #{tpu_custom_call.1} parent=39 // pred_check
          %p319 = pneg %p153
        $region54: #{tpu_custom_call.1} parent=39 // pred_check_branch
          %321 = sbr.rel (%p319) target = $region56
        $region55: #{tpu_custom_call.1} parent=39 // pred_region
          %322 = dma.done %s315, 64
        $region56: #{tpu_custom_call.1} parent=39 // pred_fallthru
          _
        %s323 = sand.u32 %s36, 1
        %s324 = scalar_lea.sflag [#allocation3], %s323
        %s325 = sand.u32 %s36, 1
        %s326 = smul.addr %s325, 16
        %s327 = scalar_lea.vmem [#allocation2], %s326
        %p328 = pneg %p49
        %p329 = pneg %p46
        %s330 = sand.u32 %s28, 1
        %s331 = scalar_lea.sflag [#allocation6], %s330
        %s332 = sand.u32 %s62, 1
        %s333 = smul.addr %s332, 4
        %s334 = scalar_lea.vmem [#allocation5], %s333
        %p335 = pneg %p75
        %p336 = pneg %p72
        %s337 = sand.u32 %s28, 1
        %s338 = scalar_lea.sflag [#allocation6], %s337
        %s339 = sand.u32 %s88, 1
        %s340 = smul.addr %s339, 4
        %s341 = scalar_lea.vmem [#allocation7], %s340
        %p342 = pneg %p101
        %p343 = pneg %p98
        %p344 = scmp.lt.s32.totalorder %s28, 1
        %s345 = scalar_select %p344, %s28, 1
        %s346 = smul.addr %s345, 4
        %s347 = scalar_lea.vmem %s3, %s346
        %p348 = pneg %p127
        %p349 = pneg %p124
        %s350 = sand.u32 %s140, 1
        %s351 = scalar_lea.sflag [#allocation9], %s350
        %s352 = sand.u32 %s140, 1
        %s353 = smul.addr %s352, 4
        %s354 = scalar_lea.vmem [#allocation8], %s353
        %p355 = pneg %p153
        %p356 = pneg %p150
        %p357 = pneg %p179
        %p358 = pneg %p176
        %s359 = sand.u32 %s166, 1
        %s360 = scalar_lea.sflag [#allocation4], %s359
        %s361 = sand.u32 %s166, 1
        %s362 = scalar_lea.vmem [#allocation10], %s361
        %p363 = scmp.lt.s32.totalorder %s28, 1
        %s364 = scalar_select %p363, %s28, 1
        %s365 = smul.addr %s364, 4
        %s366 = scalar_lea.vmem %s3, %s365
        %v367 = vld [vmem:[%s291] sm:$0xff]
        %v368 = vld [vmem:[%s291 + $0x8] sm:$0xff]
        %v369 = vld [vmem:[%s300] sm:$0xf]
        %v370 = vld [vmem:[%s309] sm:$0xf]
        %v371 = vld [vmem:[%s366] sm:$0xf]
        %v372 = vld [vmem:[%s318] sm:$0xf]
        %vm373 = vcmask 261120
        %v375 = vsel %vm373, %v369, 0
        %v378 = vsel %vm373, %v367, 0
        %v381 = vsel %vm373, %v368, 0
        %383 = vmatprep.subr.mxu0 0.0
        %384 = vmatpush1.xpose.msra.mxu0 %v378
        %385 = vmatprep.subr.mxu0 0.0
        %386 = vmatpush1.xpose.msra.mxu0 %v381
        %387 = vmatprep.subr.mxu0 0.0
        %388 = vmatpush1.xpose.msra.mxu0 0.0
        %389 = vmatprep.subr.mxu0 0.0
        %390 = vmatpush1.xpose.msra.mxu0 0.0
        %391 = vmatprep.subr.mxu0 0.0
        %392 = vmatpush1.xpose.msra.mxu0 0.0
        %393 = vmatprep.subr.mxu0 0.0
        %394 = vmatpush1.xpose.msra.mxu0 0.0
        %395 = vmatprep.subr.mxu0 0.0
        %396 = vmatpush1.xpose.msra.mxu0 0.0
        %397 = vmatprep.subr.mxu0 0.0
        %398 = vmatpush1.xpose.msra.mxu0 0.0
        %399 = vmatprep.subr.mxu0 0.0
        %400 = vmatpush1.xpose.msra.mxu0 0.0
        %401 = vmatprep.subr.mxu0 0.0
        %402 = vmatpush1.xpose.msra.mxu0 0.0
        %403 = vmatprep.subr.mxu0 0.0
        %404 = vmatpush1.xpose.msra.mxu0 0.0
        %405 = vmatprep.subr.mxu0 0.0
        %406 = vmatpush1.xpose.msra.mxu0 0.0
        %407 = vmatprep.subr.mxu0 0.0
        %408 = vmatpush1.xpose.msra.mxu0 0.0
        %409 = vmatprep.subr.mxu0 0.0
        %410 = vmatpush1.xpose.msra.mxu0 0.0
        %411 = vmatprep.subr.mxu0 0.0
        %412 = vmatpush1.xpose.msra.mxu0 0.0
        %413 = vmatprep.subr.mxu0 0.0
        %414 = vmatpush1.xpose.msra.mxu0 0.0
        %415 = vmatprep.subr.mxu0 0.0
        %416 = vmatpush1.xpose.msra.mxu0 0.0
        %417 = vmatprep.subr.mxu0 0.0
        %418 = vmatpush1.xpose.msra.mxu0 0.0
        %419 = vmatprep.subr.mxu0 0.0
        %420 = vmatpush1.xpose.msra.mxu0 0.0
        %421 = vmatprep.subr.mxu0 0.0
        %422 = vmatpush1.xpose.msra.mxu0 0.0
        %423 = vmatprep.subr.mxu0 0.0
        %424 = vmatpush1.xpose.msra.mxu0 0.0
        %425 = vmatprep.subr.mxu0 0.0
        %426 = vmatpush1.xpose.msra.mxu0 0.0
        %427 = vmatprep.subr.mxu0 0.0
        %428 = vmatpush1.xpose.msra.mxu0 0.0
        %429 = vmatprep.subr.mxu0 0.0
        %430 = vmatpush1.xpose.msra.mxu0 0.0
        %431 = vmatprep.subr.mxu0 0.0
        %432 = vmatpush1.xpose.msra.mxu0 0.0
        %433 = vmatprep.subr.mxu0 0.0
        %434 = vmatpush1.xpose.msra.mxu0 0.0
        %435 = vmatprep.subr.mxu0 0.0
        %436 = vmatpush1.xpose.msra.mxu0 0.0
        %437 = vmatprep.subr.mxu0 0.0
        %438 = vmatpush1.xpose.msra.mxu0 0.0
        %439 = vmatprep.subr.mxu0 0.0
        %440 = vmatpush1.xpose.msra.mxu0 0.0
        %441 = vmatprep.subr.mxu0 0.0
        %442 = vmatpush1.xpose.msra.mxu0 0.0
        %443 = vmatprep.subr.mxu0 0.0
        %444 = vmatpush1.xpose.msra.mxu0 0.0
        %445 = vmatprep.subr.mxu0 0.0
        %446 = vmatpush1.xpose.msra.mxu0 0.0
        %447 = vmatprep.mubr.f32.mxu0 0.0
        %448 = vmatmul.mubr.f32.gmra.mrb[0].mxu0 %v375
        %v449 = vpop.f32.mrb[0].mxu0
        %v450 = vadd.f32 0.0, %v449
        %v451 = vpop.f32.mrb[0].mxu0
        %452 = vdwg.mxu0
        %v453 = vmul.f32 %v369, %v369
        %vm454 = vcmask 257024
        %v455 = vsel %vm454, %v453, 0.0
        %456 = vadd.xlane.f32.xlu0 %v455
        %v457 = vpop.xlane.xlu0 %456
        %v458 = vmul.f32 %v367, %v367
        %v459 = vmul.f32 %v368, %v368
        %v460 = vsel %vm373, %v458, 0.0
        %461 = vadd.xlane.f32.xlu0 %v460
        %v462 = vpop.xlane.xlu0 %461
        %v463 = vsel %vm373, %v459, 0.0
        %464 = vadd.xlane.f32.xlu0 %v463
        %v465 = vpop.xlane.xlu0 %464
        %467 = vset.pattern.permute.xlu0 0
        %468 = vperm.xlu0 %467, %v370
        %v469 = vpop.permute.xlu0 %468
        %v471 = vmul.f32 %v450, %v469
        %v474 = vlaneseq
        %v475 = vand.u32 %v474, 127
        %v476 = vlaneseq
        %v477 = vshrl.u32 %v476, 7
        %v478 = vsub.s32 %v475, %v477
        %v479 = vrot.slane %v462, %v478
        %v480 = vadd.s32 %v475, 4294967288
        %v481 = vlaneseq
        %v482 = vshrl.u32 %v481, 7
        %v483 = vsub.s32 %v480, %v482
        %v484 = vrot.slane %v465, %v483
        %vm485 = vcmask 130112
        %v486 = vsel %vm485, %v484, %v479
        %vm487 = vcmask 1042434
        %v488 = vsel %vm487, %v486, %v486
        %vm489 = vcmask 1043459
        %v490 = vsel %vm489, %v486, %v488
        %v492 = vmul.f32 %v457, %v490
        %v493 = vadd.f32 %v492, 1e-06
        %v494 = vrsqrt.pop %v493
        %v495 = vmul.f32 %v471, %v494
        %vm496 = vcmask 125952
        %v497 = vsel %vm496, %v495, -inf
        %498 = vmax.xlane.f32.xlu0 %v497
        %v499 = vpop.xlane.xlu0 %498
        %v500 = vsub.f32 %v495, %v499
        %v501 = vmul.f32 %v500, 1.442695
        %v502 = vpow.pop %v501
        %v503 = vsel %vm496, %v502, 0.0
        %504 = vadd.xlane.f32.xlu0 %v503
        %v505 = vpop.xlane.xlu0 %504
        %v506 = vrcp.pop %v505
        %v507 = vmul.f32 %v502, %v506
        %508 = vset.pattern.permute.xlu0 1
        %509 = vperm.xlu0 %508, %v370
        %v510 = vpop.permute.xlu0 %509
        %v512 = vmul.f32 %v372, %v510
        %513 = vset.pattern.permute.xlu0 2
        %514 = vperm.xlu0 %513, %v370
        %v515 = vpop.permute.xlu0 %514
        %v517 = vmul.f32 %v507, %v515
        %v518 = vadd.f32 %v512, %v517
        %519 = vset.pattern.permute.xlu0 3
        %520 = vperm.xlu0 %519, %v370
        %v521 = vpop.permute.xlu0 %520
        %v523 = vmul.f32 %v371, %v521
        %v524 = vadd.f32 %v518, %v523
        %vm525 = vcmask 130048
        %v527 = vsel %vm525, %v524, 0
        %529 = vmatprep.subr.mxu0 0.0
        %530 = vmatpush1.msra.mxu0 %v367
        %531 = vmatprep.subr.mxu0 0.0
        %532 = vmatpush1.msra.mxu0 %v368
        %533 = vmatprep.subr.mxu0 0.0
        %534 = vmatpush1.msra.mxu0 0.0
        %535 = vmatprep.subr.mxu0 0.0
        %536 = vmatpush1.msra.mxu0 0.0
        %537 = vmatprep.subr.mxu0 0.0
        %538 = vmatpush1.msra.mxu0 0.0
        %539 = vmatprep.subr.mxu0 0.0
        %540 = vmatpush1.msra.mxu0 0.0
        %541 = vmatprep.subr.mxu0 0.0
        %542 = vmatpush1.msra.mxu0 0.0
        %543 = vmatprep.subr.mxu0 0.0
        %544 = vmatpush1.msra.mxu0 0.0
        %545 = vmatprep.subr.mxu0 0.0
        %546 = vmatpush1.msra.mxu0 0.0
        %547 = vmatprep.subr.mxu0 0.0
        %548 = vmatpush1.msra.mxu0 0.0
        %549 = vmatprep.subr.mxu0 0.0
        %550 = vmatpush1.msra.mxu0 0.0
        %551 = vmatprep.subr.mxu0 0.0
        %552 = vmatpush1.msra.mxu0 0.0
        %553 = vmatprep.subr.mxu0 0.0
        %554 = vmatpush1.msra.mxu0 0.0
        %555 = vmatprep.subr.mxu0 0.0
        %556 = vmatpush1.msra.mxu0 0.0
        %557 = vmatprep.subr.mxu0 0.0
        %558 = vmatpush1.msra.mxu0 0.0
        %559 = vmatprep.subr.mxu0 0.0
        %560 = vmatpush1.msra.mxu0 0.0
        %561 = vmatprep.subr.mxu0 0.0
        %562 = vmatpush1.msra.mxu0 0.0
        %563 = vmatprep.subr.mxu0 0.0
        %564 = vmatpush1.msra.mxu0 0.0
        %565 = vmatprep.subr.mxu0 0.0
        %566 = vmatpush1.msra.mxu0 0.0
        %567 = vmatprep.subr.mxu0 0.0
        %568 = vmatpush1.msra.mxu0 0.0
        %569 = vmatprep.subr.mxu0 0.0
        %570 = vmatpush1.msra.mxu0 0.0
        %571 = vmatprep.subr.mxu0 0.0
        %572 = vmatpush1.msra.mxu0 0.0
        %573 = vmatprep.subr.mxu0 0.0
        %574 = vmatpush1.msra.mxu0 0.0
        %575 = vmatprep.subr.mxu0 0.0
        %576 = vmatpush1.msra.mxu0 0.0
        %577 = vmatprep.subr.mxu0 0.0
        %578 = vmatpush1.msra.mxu0 0.0
        %579 = vmatprep.subr.mxu0 0.0
        %580 = vmatpush1.msra.mxu0 0.0
        %581 = vmatprep.subr.mxu0 0.0
        %582 = vmatpush1.msra.mxu0 0.0
        %583 = vmatprep.subr.mxu0 0.0
        %584 = vmatpush1.msra.mxu0 0.0
        %585 = vmatprep.subr.mxu0 0.0
        %586 = vmatpush1.msra.mxu0 0.0
        %587 = vmatprep.subr.mxu0 0.0
        %588 = vmatpush1.msra.mxu0 0.0
        %589 = vmatprep.subr.mxu0 0.0
        %590 = vmatpush1.msra.mxu0 0.0
        %591 = vmatprep.subr.mxu0 0.0
        %592 = vmatpush1.msra.mxu0 0.0
        %593 = vmatprep.mubr.f32.mxu0 0.0
        %594 = vmatmul.mubr.f32.gmra.mrb[0].mxu0 %v527
        %v595 = vpop.f32.mrb[0].mxu0
        %v596 = vadd.f32 0.0, %v595
        %v597 = vpop.f32.mrb[0].mxu0
        %598 = vdwg.mxu0
        %v600 = vunpack.c.l.s4 1983009808
        %v601 = vunpack.c.0.s8 %v600
        %v602 = vlaneseq
        %v603 = vshrl.u32 %v602, 7
        %v604 = vsub.s32 %v601, %v603
        %v605 = vrot.slane %v596, %v604
        %v606 = vcombine.high %v605, 0.0
        %v608 = vunpack.c.l.s4 1934713408
        %v609 = vunpack.c.0.s8 %v608
        %v610 = vlaneseq
        %v611 = vshrl.u32 %v610, 7
        %v612 = vsub.s32 %v609, %v611
        %v613 = vrot.slane %v605, %v612
        %v615 = vunpack.c.l.s4 1934713408
        %v616 = vunpack.c.0.s8 %v615
        %v617 = vlaneseq
        %v618 = vshrl.u32 %v617, 7
        %v619 = vsub.s32 %v616, %v618
        %v620 = vrot.slane %v606, %v619
        %v621 = vcombine.high %v613, 0.0
        %v622 = vcombine.high %v620, 0.0
        %624 = vrot.lane.b32.xlu0 %v621, 32
        %v625 = vpop.permute.xlu0 %624
        %628 = vrot.lane.b32.xlu0 %v620, 64
        %v629 = vpop.permute.xlu0 %628
        %632 = vrot.lane.b32.xlu0 %v622, 96
        %v633 = vpop.permute.xlu0 %632
        %v635 = vsel %vm373, %v613, %v625
        %vm636 = vcmask 523264
        %v637 = vsel %vm636, %v635, %v629
        %vm638 = vcmask 785408
        %v639 = vsel %vm638, %v637, %v633
        %640 = vst [vmem:[%s362] sm:$0x1] %v639
        %s641 = sand.u32 %s166, 1
        %s642 = scalar_lea.sflag [#allocation4], %s641
        %s643 = sand.u32 %s166, 1
        %s644 = scalar_lea.vmem [#allocation10], %s643
        // Predicated region
        $region57: #{tpu_custom_call.1} parent=39 // pred_check
          %p645 = pneg %p176
        $region58: #{tpu_custom_call.1} parent=39 // pred_check_branch
          %647 = sbr.rel (%p645) target = $region60
        $region59: #{tpu_custom_call.1} parent=39 // pred_region
          %s649 = ssub.s32 16, 16
          %650 = vsyncadd %s642, %s649
          %s651 = smul.addr %s28, 16
          %s652 = scalar_lea.hbm %s5, %s651
          %s654 = sshll.u32 %s644, 4
          %s655 = int_to_ptr.vmem [resolvable:$true] %s654
          %657 = dma.vmem_to_hbm [thread:$0]  %s655, 16, %s652, %s642
        $region60: #{tpu_custom_call.1} parent=39 // pred_fallthru
          _
      $region40: #{tpu_custom_call.1} parent=5 // pred_fallthru
        _
      %p658 = scmp.le.s32.totalorder 2, %s23
      // Predicated region
      $region61: #{tpu_custom_call.1} parent=5 // pred_check
        %p659 = pneg %p658
      $region62: #{tpu_custom_call.1} parent=5 // pred_check_branch
        %661 = sbr.rel (%p659) target = $region64
      $region63: #{tpu_custom_call.1} parent=5 // pred_region
        %s662 = ssub.s32 %s23, 2
        // Predicated region
        $region65: #{tpu_custom_call.1} parent=63 // pred_check
          %p663 = pneg %p182
        $region66: #{tpu_custom_call.1} parent=63 // pred_check_branch
          %665 = sbr.rel (%p663) target = $region68
        $region67: #{tpu_custom_call.1} parent=63 // pred_region
          %s666 = sand.u32 %s167, 1
          %s667 = scalar_lea.sflag [#allocation4], %s666
          %s668 = sand.u32 %s167, 1
          %s669 = scalar_lea.vmem [#allocation10], %s668
          %670 = dma.done %s667, 16
        $region68: #{tpu_custom_call.1} parent=63 // pred_fallthru
          _
      $region64: #{tpu_custom_call.1} parent=5 // pred_fallthru
        _
    $region6: #{tpu_custom_call.1} parent=1 // loop_footer
      %s27 = sadd.s32 1, %s23
    $region7: #{tpu_custom_call.1} parent=1 // loop_footer_branch
      %22 = sbr.rel target = $region3
    $region8: #{tpu_custom_call.1} parent=1 // loop_exit
      _
    %671 = vsyncpa [#allocation3], 1
    %s672 = scalar_lea.sflag [#allocation3], 1
    %673 = vsyncpa %s672, 1
    %674 = vsyncpa [#allocation6], 1
    %s675 = scalar_lea.sflag [#allocation6], 1
    %676 = vsyncpa %s675, 1
    %677 = vsyncpa [#allocation9], 1
    %s678 = scalar_lea.sflag [#allocation9], 1
    %679 = vsyncpa %s678, 1
    %680 = vsyncpa [#allocation4], 1
    %s681 = scalar_lea.sflag [#allocation4], 1
    %682 = vsyncpa %s681, 1

</llo_original>
